<compile_context>
chip_gen: v6e
topology: v6e:2x2x1
jax: 0.10.0
libtpu: 0.0.40
codegen_flags: <defaults>
</compile_context>

<pallas_src>
import functools
import math

import jax
import jax.numpy as jnp
import numpy as np
from jax.experimental import pallas as pl
from jax.experimental.pallas import tpu as pltpu


def _encouraging_loss_kernel(x_ref, t_ref, o_ref, *, log_end, n_total, tm):
    i = pl.program_id(0)

    x = x_ref[...].astype(jnp.float32)                      # (TM, C)

    # Numerically stable log-sum-exp over the class (lane) dim.
    m = jnp.max(x, axis=-1, keepdims=True)                  # (TM, 1)
    z = x - m                                               # (TM, C)
    e = jnp.exp(z)                                          # single full-width EUP pass
    sumexp = jnp.sum(e, axis=-1, keepdims=True)             # (TM, 1)
    lse = jnp.log(sumexp)                                   # (TM, 1), tiny EUP

    # Gather z[row, target[row]] via one-hot mask (no dynamic gather on TPU).
    tgt = t_ref[...]                                        # (TM, 1) int32
    col = jax.lax.broadcasted_iota(jnp.int32, z.shape, 1)   # (TM, C)
    picked_z = jnp.sum(jnp.where(col == tgt, z, 0.0), axis=-1, keepdims=True)

    # Per-row log-prob / prob of the target class only.
    picked_lprob = picked_z - lse                           # (TM, 1)
    picked_prob = jnp.exp(picked_lprob)                     # (TM, 1), tiny EUP

    # Encouraging bonus evaluated only on the picked values.
    bonus = jnp.log(jnp.maximum(1.0 - picked_prob, 1e-5))
    if log_end != 1.0:
        y_log_end = math.log(1.0 - log_end)
        bonus_after = (1.0 / (log_end - 1.0)) * (picked_prob - log_end) + y_log_end
        bonus = jnp.where(picked_prob > log_end, bonus_after, bonus)

    row_loss = -(picked_lprob - bonus)                      # (TM, 1)

    # Mask padded rows (global row id >= n_total contributes 0).
    row = i * tm + jax.lax.broadcasted_iota(jnp.int32, row_loss.shape, 0)
    row_loss = jnp.where(row < n_total, row_loss, 0.0)

    block_sum = jnp.sum(row_loss)                           # scalar per block

    # Lane-dense (8, 128) partial-sum tile; block sum lives at [0, 0].
    sub = jax.lax.broadcasted_iota(jnp.int32, (8, 128), 0)
    lane = jax.lax.broadcasted_iota(jnp.int32, (8, 128), 1)
    o_ref[...] = jnp.where((sub == 0) & (lane == 0), block_sum, 0.0)


def _choose_tm(n, c, *, per_tile_bytes=2 * 1024 * 1024, tm_cap=1024):
    """Largest multiple-of-8 row tile with (TM * C * 4B) <= per_tile_bytes."""
    n_pad8 = max(8, ((n + 7) // 8) * 8)
    tm = per_tile_bytes // (c * 4)
    tm = max(8, (tm // 8) * 8)
    tm = min(tm, tm_cap, n_pad8)
    return int(tm)


def encouraging_loss(logits, target, log_end=0.75, reduction="mean"):
    """Pallas TPU implementation of EncouragingLoss.forward."""
    assert reduction in ("mean", "sum"), "only 'mean'/'sum' reductions implemented"
    N, C = logits.shape

    TM = _choose_tm(N, C)
    num_blocks = -(-N // TM)
    N_pad = num_blocks * TM

    if N_pad != N:
        logits = jnp.pad(logits, ((0, N_pad - N), (0, 0)))
        target = jnp.pad(target, (0, N_pad - N))
    tgt2d = target.reshape(N_pad, 1).astype(jnp.int32)

    kernel = functools.partial(
        _encouraging_loss_kernel, log_end=float(log_end), n_total=N, tm=TM
    )

    partials = pl.pallas_call(
        kernel,
        out_shape=jax.ShapeDtypeStruct((num_blocks * 8, 128), jnp.float32),
        grid_spec=pltpu.PrefetchScalarGridSpec(
            num_scalar_prefetch=0,
            grid=(num_blocks,),
            in_specs=[
                pl.BlockSpec((TM, C), lambda i: (i, 0)),
                pl.BlockSpec((TM, 1), lambda i: (i, 0)),
            ],
            out_specs=pl.BlockSpec((8, 128), lambda i: (i, 0)),
        ),
        compiler_params=pltpu.CompilerParams(
            dimension_semantics=("parallel",),
            vmem_limit_bytes=32 * 1024 * 1024,
        ),
    )(logits, tgt2d)

    total = jnp.sum(partials)
    if reduction == "mean":
        return total / jnp.float32(N)
    return total


def encouraging_loss_ref(logits, target, log_end=0.75):
    """Pure-JAX reference mirroring the PyTorch module (reduction='mean')."""
    lprobs = jax.nn.log_softmax(logits.astype(jnp.float32), axis=-1)
    probs = jnp.exp(lprobs)
    bonus = jnp.log(jnp.clip(1.0 - probs, 1e-5, None))
    if log_end != 1.0:
        y_log_end = jnp.log(1.0 - log_end)
        bonus_after = 1.0 / (log_end - 1.0) * (probs - log_end) + y_log_end
        bonus = jnp.where(probs > log_end, bonus_after, bonus)
    adj = lprobs - bonus
    picked = jnp.take_along_axis(adj, target.reshape(-1, 1), axis=-1)[:, 0]
    return -jnp.mean(picked)


if __name__ == "__main__":
    key = jax.random.PRNGKey(0)

    # Test 1: N=16 samples, C=128 classes (tile-aligned).
    k1, k2, k3, k4 = jax.random.split(key, 4)
    N, C = 16, 128
    logits = jax.random.normal(k1, (N, C), dtype=jnp.float32) * 3.0
    target = jax.random.randint(k2, (N,), 0, C, dtype=jnp.int32)

    loss = jax.block_until_ready(encouraging_loss(logits, target, log_end=0.75))
    ref = jax.block_until_ready(encouraging_loss_ref(logits, target, log_end=0.75))
    np.testing.assert_allclose(np.asarray(loss), np.asarray(ref), rtol=1e-5, atol=1e-5)

    # Test 2: ragged N (not a multiple of 8) exercises the padding mask.
    N2, C2 = 13, 256
    logits2 = jax.random.normal(k3, (N2, C2), dtype=jnp.float32) * 2.0
    target2 = jax.random.randint(k4, (N2,), 0, C2, dtype=jnp.int32)

    loss2 = jax.block_until_ready(encouraging_loss(logits2, target2, log_end=0.75))
    ref2 = jax.block_until_ready(encouraging_loss_ref(logits2, target2, log_end=0.75))
    np.testing.assert_allclose(np.asarray(loss2), np.asarray(ref2), rtol=1e-5, atol=1e-5)

    print("KERNEL_OK")
</pallas_src>

<mosaic_0001>
module attributes {stable_mosaic.version = 11 : i64} {
  func.func @_encouraging_loss_kernel(%arg0: i32, %arg1: memref<16x128xf32, #tpu.memory_space<vmem>>, %arg2: memref<16x1xi32, #tpu.memory_space<vmem>>, %arg3: memref<8x128xf32, #tpu.memory_space<vmem>>) attributes {dimension_semantics = [#tpu.dimension_semantics<parallel>], iteration_bounds = array<i64: 1>, scalar_prefetch = 0 : i64, scratch_operands = 0 : i64, tpu.core_type = #tpu.core_type<tc>, window_params = [{transform_indices = @transform_0, window_bounds = array<i64: 16, 128>}, {transform_indices = @transform_1, window_bounds = array<i64: 16, 1>}, {transform_indices = @transform_2, window_bounds = array<i64: 8, 128>}]} {
    %c0 = arith.constant 0 : index
    %c0_0 = arith.constant 0 : index
    %0 = vector.load %arg1[%c0, %c0_0] : memref<16x128xf32, #tpu.memory_space<vmem>>, vector<16x128xf32>
    %cst = arith.constant dense<0xFF800000> : vector<16xf32>
    %1 = vector.multi_reduction <maximumf>, %0, %cst [1] : vector<16x128xf32> to vector<16xf32>
    %2 = vector.shape_cast %1 : vector<16xf32> to vector<16x1xf32>
    %3 = vector.broadcast %2 : vector<16x1xf32> to vector<16x128xf32>
    %4 = arith.subf %0, %3 : vector<16x128xf32>
    %5 = math.exp %4 : vector<16x128xf32>
    %cst_1 = arith.constant dense<0.000000e+00> : vector<16xf32>
    %6 = vector.multi_reduction <add>, %5, %cst_1 [1] : vector<16x128xf32> to vector<16xf32>
    %7 = vector.shape_cast %6 : vector<16xf32> to vector<16x1xf32>
    %8 = math.log %7 : vector<16x1xf32>
    %c0_2 = arith.constant 0 : index
    %c0_3 = arith.constant 0 : index
    %9 = vector.load %arg2[%c0_2, %c0_3] : memref<16x1xi32, #tpu.memory_space<vmem>>, vector<16x1xi32>
    %10 = tpu.iota {dimensions = array<i32: 1>} : vector<16x128xi32>
    %11 = vector.broadcast %9 : vector<16x1xi32> to vector<16x128xi32>
    %12 = arith.cmpi eq, %10, %11 : vector<16x128xi32>
    %cst_4 = arith.constant 0.000000e+00 : f32
    %13 = vector.broadcast %cst_4 : f32 to vector<16x128xf32>
    %14 = arith.select %12, %4, %13 : vector<16x128xi1>, vector<16x128xf32>
    %cst_5 = arith.constant dense<0.000000e+00> : vector<16xf32>
    %15 = vector.multi_reduction <add>, %14, %cst_5 [1] : vector<16x128xf32> to vector<16xf32>
    %16 = vector.shape_cast %15 : vector<16xf32> to vector<16x1xf32>
    %17 = arith.subf %16, %8 : vector<16x1xf32>
    %18 = math.exp %17 : vector<16x1xf32>
    %cst_6 = arith.constant 1.000000e+00 : f32
    %19 = vector.broadcast %cst_6 : f32 to vector<16x1xf32>
    %20 = arith.subf %19, %18 : vector<16x1xf32>
    %cst_7 = arith.constant 9.99999974E-6 : f32
    %21 = vector.broadcast %cst_7 : f32 to vector<16x1xf32>
    %22 = arith.maximumf %20, %21 : vector<16x1xf32>
    %23 = math.log %22 : vector<16x1xf32>
    %cst_8 = arith.constant 7.500000e-01 : f32
    %24 = vector.broadcast %cst_8 : f32 to vector<16x1xf32>
    %25 = arith.subf %18, %24 : vector<16x1xf32>
    %cst_9 = arith.constant -4.000000e+00 : f32
    %26 = vector.broadcast %cst_9 : f32 to vector<16x1xf32>
    %27 = arith.mulf %26, %25 : vector<16x1xf32>
    %cst_10 = arith.constant -1.38629436 : f32
    %28 = vector.broadcast %cst_10 : f32 to vector<16x1xf32>
    %29 = arith.addf %27, %28 : vector<16x1xf32>
    %cst_11 = arith.constant 7.500000e-01 : f32
    %30 = vector.broadcast %cst_11 : f32 to vector<16x1xf32>
    %31 = arith.cmpf ogt, %18, %30 : vector<16x1xf32>
    %32 = arith.select %31, %29, %23 : vector<16x1xi1>, vector<16x1xf32>
    %33 = arith.subf %17, %32 : vector<16x1xf32>
    %cst_12 = arith.constant 0.000000e+00 : f32
    %34 = vector.broadcast %cst_12 : f32 to vector<16x1xf32>
    %35 = arith.subf %34, %33 : vector<16x1xf32>
    %c16_i32 = arith.constant 16 : i32
    %36 = arith.muli %arg0, %c16_i32 : i32
    %37 = tpu.iota {dimensions = array<i32: 0>} : vector<16x1xi32>
    %38 = vector.broadcast %36 : i32 to vector<16x1xi32>
    %39 = arith.addi %38, %37 : vector<16x1xi32>
    %c16_i32_13 = arith.constant 16 : i32
    %40 = vector.broadcast %c16_i32_13 : i32 to vector<16x1xi32>
    %41 = arith.cmpi slt, %39, %40 : vector<16x1xi32>
    %cst_14 = arith.constant 0.000000e+00 : f32
    %42 = vector.broadcast %cst_14 : f32 to vector<16x1xf32>
    %43 = arith.select %41, %35, %42 : vector<16x1xi1>, vector<16x1xf32>
    %44 = vector.shape_cast %43 : vector<16x1xf32> to vector<1x16x1xf32>
    %cst_15 = arith.constant dense<0.000000e+00> : vector<1xf32>
    %45 = vector.multi_reduction <add>, %44, %cst_15 [1, 2] : vector<1x16x1xf32> to vector<1xf32>
    %46 = vector.shape_cast %45 : vector<1xf32> to vector<1x1x1xf32>
    %47 = vector.extract %46[0, 0, 0] : f32 from vector<1x1x1xf32>
    %48 = tpu.iota {dimensions = array<i32: 0>} : vector<8x128xi32>
    %49 = tpu.iota {dimensions = array<i32: 1>} : vector<8x128xi32>
    %c0_i32 = arith.constant 0 : i32
    %50 = vector.broadcast %c0_i32 : i32 to vector<8x128xi32>
    %51 = arith.cmpi eq, %48, %50 : vector<8x128xi32>
    %c0_i32_16 = arith.constant 0 : i32
    %52 = vector.broadcast %c0_i32_16 : i32 to vector<8x128xi32>
    %53 = arith.cmpi eq, %49, %52 : vector<8x128xi32>
    %54 = arith.andi %51, %53 : vector<8x128xi1>
    %cst_17 = arith.constant 0.000000e+00 : f32
    %55 = vector.broadcast %47 : f32 to vector<8x128xf32>
    %56 = vector.broadcast %cst_17 : f32 to vector<8x128xf32>
    %57 = arith.select %54, %55, %56 : vector<8x128xi1>, vector<8x128xf32>
    %c0_18 = arith.constant 0 : index
    %c0_19 = arith.constant 0 : index
    %58 = vector.load %arg3[%c0_18, %c0_19] : memref<8x128xf32, #tpu.memory_space<vmem>>, vector<8x128xf32>
    tpu.vector_store %arg3[%c0_18, %c0_19], %57 {strides = array<i32>} : memref<8x128xf32, #tpu.memory_space<vmem>>, vector<8x128xf32>,
    return
  }
  func.func @transform_0(%arg0: i32) -> (i32, i32) {
    %c0_i32 = arith.constant 0 : i32
    %c0_i32_0 = arith.constant 0 : i32
    return %arg0, %c0_i32 : i32, i32
  }
  func.func @transform_1(%arg0: i32) -> (i32, i32) {
    %c0_i32 = arith.constant 0 : i32
    %c0_i32_0 = arith.constant 0 : i32
    return %arg0, %c0_i32 : i32, i32
  }
  func.func @transform_2(%arg0: i32) -> (i32, i32) {
    %c0_i32 = arith.constant 0 : i32
    %c0_i32_0 = arith.constant 0 : i32
    return %arg0, %c0_i32 : i32, i32
  }
}

</mosaic_0001>

<llo_original>
// kernel: tpu_custom_call.1
$region0: #{tpu_custom_call.1}
  #allocation0 [shape = 'u32[]', space=smem, size = 0x4, offset = 0x4, fixed_abs, tag = 'smem constant byte address 0x4 - core index']
  #allocation1 [shape = 'u32[144,128]{1,0:T(1,128)}', space=vmem, size = 0x12000, scoped, tag = 'internal scratch']
  %s0 = inlined_call_operand.vmem [shape: f32[16,128], index: 0, kind: input, shape index: {}]
  %s1 = inlined_call_operand.vmem [shape: s32[16,1], index: 1, kind: input, shape index: {}]
  %s2 = inlined_call_operand.hbm [shape: f32[8,128], index: 2, kind: output, shape index: {}]
  %s3 = sld [smem:[#allocation0]]
  $region18: #{tpu_custom_call.1} parent=0
    _
  %s5 = ssub.s32 1, %s3
  %s6 = scalar_select 0, %s5, %s3
  $region1: #{tpu_custom_call.1} parent=0
    #allocation2 [shape = 'u8[4096]{0}', space=vmem, size = 0x1000, scoped, tag = 'output window, operand 0, single buffered']
    #allocation3 [shape = 's32[1]{0}', space=sflag, size = 0x4, scoped, tag = 'scoped memory for tpu_custom_call.1']
    %7 = vsyncpa [#allocation3], 0
    // Predicated region
    $region2: #{tpu_custom_call.1} parent=1 // pred_check
      _
    $region3: #{tpu_custom_call.1} parent=1 // pred_check_branch
      %9 = sbr.rel (0) target = $region5
    $region4: #{tpu_custom_call.1} parent=1 // pred_region
      _
    $region5: #{tpu_custom_call.1} parent=1 // pred_fallthru
      _
    // Predicated region
    $region6: #{tpu_custom_call.1} parent=1 // pred_check
      _
    $region7: #{tpu_custom_call.1} parent=1 // pred_check_branch
      %11 = sbr.rel (0) target = $region9
    $region8: #{tpu_custom_call.1} parent=1 // pred_region
      _
    $region9: #{tpu_custom_call.1} parent=1 // pred_fallthru
      _
    %v12 = vld [vmem:[%s0] sm:$0xff]
    %v13 = vld [vmem:[%s0 + $0x8] sm:$0xff]
    %14 = vmax.xlane.f32.xlu0 %v12
    %v15 = vpop.xlane.xlu0 %14
    %16 = vmax.xlane.f32.xlu0 %v13
    %v17 = vpop.xlane.xlu0 %16
    %v18 = vsub.f32 %v12, %v15
    %v19 = vsub.f32 %v13, %v17
    %v20 = vmul.f32 %v18, 1.442695
    %v21 = vpow.pop %v20
    %v22 = vmul.f32 %v19, 1.442695
    %v23 = vpow.pop %v22
    %24 = vadd.xlane.f32.xlu0 %v21
    %v25 = vpop.xlane.xlu0 %24
    %26 = vadd.xlane.f32.xlu0 %v23
    %v27 = vpop.xlane.xlu0 %26
    %v28 = vlog2.pop %v25
    %v29 = vmul.f32 %v28, 0.6931472
    %v30 = vlog2.pop %v27
    %v31 = vmul.f32 %v30, 0.6931472
    %v32 = vld [vmem:[%s1] sm:$0xff]
    %v33 = vld [vmem:[%s1 + $0x8] sm:$0xff]
    %v34 = vlaneseq
    %v35 = vand.u32 %v34, 127
    %36 = vset.pattern.permute.xlu0 0
    %37 = vperm.xlu0 %36, %v32
    %v38 = vpop.permute.xlu0 %37
    %39 = vset.pattern.permute.xlu0 0
    %40 = vperm.xlu0 %39, %v33
    %v41 = vpop.permute.xlu0 %40
    %vm42 = vcmp.eq.s32.totalorder %v35, %v38
    %vm43 = vcmp.eq.s32.totalorder %v35, %v41
    %v44 = vsel %vm42, %v18, 0.0
    %v45 = vsel %vm43, %v19, 0.0
    %46 = vadd.xlane.f32.xlu0 %v44
    %v47 = vpop.xlane.xlu0 %46
    %48 = vadd.xlane.f32.xlu0 %v45
    %v49 = vpop.xlane.xlu0 %48
    %v50 = vsub.f32 %v47, %v29
    %v51 = vsub.f32 %v49, %v31
    %v52 = vmul.f32 %v50, 1.442695
    %v53 = vpow.pop %v52
    %v54 = vmul.f32 %v51, 1.442695
    %v55 = vpow.pop %v54
    %v56 = vsub.f32 1.0, %v53
    %v57 = vsub.f32 1.0, %v55
    %v58 = vmax.f32 %v56, 1e-05
    %v59 = vmax.f32 %v57, 1e-05
    %v60 = vlog2.pop %v58
    %v61 = vmul.f32 %v60, 0.6931472
    %v62 = vlog2.pop %v59
    %v63 = vmul.f32 %v62, 0.6931472
    %v64 = vsub.f32 %v53, 0.75
    %v65 = vsub.f32 %v55, 0.75
    %v66 = vmul.f32 %v64, -4.0
    %v67 = vmul.f32 %v65, -4.0
    %v68 = vadd.f32 %v66, -1.3862944
    %v69 = vadd.f32 %v67, -1.3862944
    %vm70 = vcmp.gt.f32.partialorder %v53, 0.75
    %vm71 = vcmp.gt.f32.partialorder %v55, 0.75
    %v72 = vsel %vm70, %v68, %v61
    %v73 = vsel %vm71, %v69, %v63
    %v74 = vsub.f32 %v50, %v72
    %v75 = vsub.f32 %v51, %v73
    %v76 = vsub.f32 0.0, %v74
    %v77 = vsub.f32 0.0, %v75
    %s78 = smul.u32 0, 16
    %v79 = vlaneseq
    %v80 = vshrl.u32 %v79, 7
    %v81 = vadd.s32 %v80, 8
    %v82 = vstv %s78
    %v83 = vadd.s32 %v82, %v80
    %v84 = vadd.s32 %v82, %v81
    %vm85 = vcmp.lt.s32.totalorder %v83, 16
    %vm86 = vcmp.lt.s32.totalorder %v84, 16
    %v87 = vsel %vm85, %v76, 0.0
    %v88 = vsel %vm86, %v77, 0.0
    %vm89 = vcmask 7168
    %v90 = vsel %vm89, %v87, 0.0
    %v91 = vsel %vm89, %v88, 0.0
    %v92 = vadd.f32 %v90, %v91
    %93 = vadd.xlane.f32.xlu0 %v92
    %v94 = vpop.xlane.xlu0 %93
    %v95 = vrot.slane %v94, 4
    %v96 = vadd.f32 %v94, %v95
    %v97 = vrot.slane %v96, 2
    %v98 = vadd.f32 %v96, %v97
    %v99 = vrot.slane %v98, 1
    %v100 = vadd.f32 %v98, %v99
    %s101 = vtos %v100
    %vm102 = vcmp.eq.s32.totalorder %v80, 0
    %vm103 = vcmp.eq.s32.totalorder %v35, 0
    %vm104 = vmand %vm102, %vm103
    %v105 = vstv %s101
    %v106 = vsel %vm104, %v105, 0.0
    %107 = vst [vmem:[#allocation2] sm:$0xff] %v106
    // Predicated region
    $region10: #{tpu_custom_call.1} parent=1 // pred_check
      _
    $region11: #{tpu_custom_call.1} parent=1 // pred_check_branch
      %109 = sbr.rel (0) target = $region13
    $region12: #{tpu_custom_call.1} parent=1 // pred_region
      %s111 = ssub.s32 128, 128
      %112 = vsyncadd [#allocation3], %s111
      %s114 = sshll.u32 [#allocation2], 4
      %s115 = int_to_ptr.vmem [resolvable:$true] %s114
      %117 = dma.vmem_to_hbm [thread:$0]  %s115, 128, %s2, [#allocation3]
    $region13: #{tpu_custom_call.1} parent=1 // pred_fallthru
      _
    // Predicated region
    $region14: #{tpu_custom_call.1} parent=1 // pred_check
      _
    $region15: #{tpu_custom_call.1} parent=1 // pred_check_branch
      %119 = sbr.rel (0) target = $region17
    $region16: #{tpu_custom_call.1} parent=1 // pred_region
      %120 = dma.done [#allocation3], 128
    $region17: #{tpu_custom_call.1} parent=1 // pred_fallthru
      _
    %121 = vsyncpa [#allocation3], 1

</llo_original>
